<compile_context>
chip_gen: v7x
topology: tpu7x:2x2x1
jax: 0.10.0
libtpu: 0.0.40
codegen_flags: <defaults>
</compile_context>

<pallas_src>
import jax
import jax.numpy as jnp
from jax import lax
from jax.experimental import pallas as pl
from jax.experimental.pallas import tpu as pltpu


def _inverted_embedding_kernel(x_ref, w_ref, b_ref, o_ref):
    # x_ref: (TB, T, TV)   w_ref: (T, Dp)   b_ref: (1, Dp)   o_ref: (TB, TV, Dp)
    w_td = w_ref[...]
    bias = b_ref[...]
    tb = x_ref.shape[0]
    for i in range(tb):  # TB is a small static constant -> unrolled
        # Contract over T: (T, TV) x (T, Dp) -> (TV, Dp) on the MXU, f32 acc.
        acc = lax.dot_general(
            x_ref[i], w_td,
            dimension_numbers=(((0,), (0,)), ((), ())),
            preferred_element_type=jnp.float32,
        )
        o_ref[i] = (acc + bias).astype(o_ref.dtype)


def _round_up(x, m):
    return ((x + m - 1) // m) * m


def _vmem_budget_bytes():
    """~70% of physical VMEM; falls back to the v7x (smallest) capacity."""
    cap = 64 * 1024 * 1024
    try:
        cap = int(pltpu.get_tpu_info().vmem_capacity_bytes)
    except Exception:
        pass
    return int(0.7 * cap), cap


def _select_tiles(B, T, V, Dp, itemsize, budget_bytes):
    """Pick (TB, TV) maximizing DMA size under the VMEM budget.

    Footprint model: double-buffered x and out tiles plus (conservatively)
    double-buffered resident weight and bias.
    """
    resident = 2 * (T * Dp + Dp) * itemsize

    def fits(tb, tv):
        x_bytes = tb * T * tv * itemsize
        o_bytes = tb * tv * Dp * itemsize
        return 2 * (x_bytes + o_bytes) + resident <= budget_bytes

    # Prefer full-V (turns the strided x read into one contiguous slab),
    # otherwise the largest 128-multiple that divides V.
    tv_cands = [V] + [c for c in (2048, 1024, 512, 256, 128) if c < V and V % c == 0]
    tv = next((t for t in tv_cands if fits(1, t)), tv_cands[-1])

    # Grow the batch tile to amortize per-step overhead (common small-V case).
    tb_cands = [b for b in range(B, 0, -1) if B % b == 0]
    tb = next((b for b in tb_cands if fits(b, tv)), 1)

    # Keep >= 2 grid steps when possible so v7x's 2 TensorCores both get work
    # under "parallel" semantics (cost: one extra ~0.35us step).
    if B > 1 and (B // tb) * (V // tv) < 2:
        tb = next(b for b in tb_cands if 2 * b <= B)

    footprint = 2 * (tb * T * tv + tb * tv * Dp) * itemsize + resident
    return tb, tv, footprint


def embedding_inverted(x, weight, bias):
    """x: (B, T, V), weight: (D, T) [nn.Linear layout], bias: (D,) -> (B, V, D)."""
    B, T, V = x.shape
    D = weight.shape[0]

    # Pre-transpose the weight once (tiny) so there is no per-step relayout.
    w_td = jnp.transpose(weight).astype(x.dtype)        # (T, D)
    bias2d = bias.reshape(1, D).astype(x.dtype)

    # Pad D to a lane-dense multiple of 128 (unmasked stores); sliced back below.
    Dp = D if D % 128 == 0 else _round_up(D, 128)
    if Dp != D:
        w_td = jnp.pad(w_td, ((0, 0), (0, Dp - D)))
        bias2d = jnp.pad(bias2d, ((0, 0), (0, Dp - D)))

    itemsize = x.dtype.itemsize
    budget, cap = _vmem_budget_bytes()
    TB, TV, footprint = _select_tiles(B, T, V, Dp, itemsize, budget)
    # Explicit limit (v5e default scoped VMEM is only 16 MiB); never above cap.
    vmem_limit = min(max(footprint + (8 << 20), 32 << 20), cap)

    grid = (B // TB, V // TV)

    def _call(single_buffer_resident):
        resident_kwargs = (
            {"pipeline_mode": pl.Buffered(1)} if single_buffer_resident else {}
        )
        return pl.pallas_call(
            _inverted_embedding_kernel,
            out_shape=jax.ShapeDtypeStruct((B, V, Dp), x.dtype),
            grid_spec=pltpu.PrefetchScalarGridSpec(
                num_scalar_prefetch=0,
                grid=grid,
                in_specs=[
                    # x in native (B, T, V) layout: block (TB, T, TV)
                    pl.BlockSpec((TB, T, TV), lambda b, v: (b, 0, v)),
                    # weight (T, Dp): grid-invariant, stays resident
                    pl.BlockSpec((T, Dp), lambda b, v: (0, 0), **resident_kwargs),
                    # bias (1, Dp): grid-invariant
                    pl.BlockSpec((1, Dp), lambda b, v: (0, 0), **resident_kwargs),
                ],
                out_specs=pl.BlockSpec((TB, TV, Dp), lambda b, v: (b, v, 0)),
            ),
            compiler_params=pltpu.CompilerParams(
                dimension_semantics=("parallel", "parallel"),
                vmem_limit_bytes=vmem_limit,
            ),
        )(x, w_td, bias2d)

    try:
        out = _call(True)
    except Exception:
        # Fallback if this jax build rejects pl.Buffered(1) on grid-invariant
        # operands; the VMEM budget already accounts for default buffering.
        out = _call(False)

    if Dp != D:
        out = out[:, :, :D]

    # TODO(synk): Dropout(0.1) is identity in eval mode; training-mode dropout
    # (pltpu.prng_seed + random-bits mask + 1/(1-p) scale fused in the kernel
    # epilogue) is not applied here.
    return out


if __name__ == "__main__":
    B, T, V, D = 2, 8, 4, 32  # batch, time (Linear in-features), variates, hidden
    key = jax.random.PRNGKey(0)
    kx, kw, kb = jax.random.split(key, 3)

    x = jax.random.normal(kx, (B, T, V), dtype=jnp.float32)
    # Deterministic init mimicking nn.Linear(T, D): weight (D, T), bias (D,)
    bound = 1.0 / (T ** 0.5)
    weight = jax.random.uniform(kw, (D, T), minval=-bound, maxval=bound,
                                dtype=jnp.float32)
    bias = jax.random.uniform(kb, (D,), minval=-bound, maxval=bound,
                              dtype=jnp.float32)

    out = embedding_inverted(x, weight, bias)
    out = jax.block_until_ready(out)

    # Reference (PyTorch eval-mode forward): permute + Linear, dropout = identity.
    ref = jnp.einsum("bvt,dt->bvd", jnp.transpose(x, (0, 2, 1)), weight) + bias
    assert out.shape == (B, V, D)
    assert jnp.allclose(out, ref, atol=1e-5, rtol=1e-5)
    print("KERNEL_OK")
</pallas_src>

<mosaic_0001>
module attributes {stable_mosaic.version = 11 : i64} {
  func.func @_inverted_embedding_kernel(%arg0: i32, %arg1: i32, %arg2: memref<1x8x4xf32, #tpu.memory_space<vmem>>, %arg3: memref<8x128xf32, #tpu.memory_space<vmem>>, %arg4: memref<1x128xf32, #tpu.memory_space<vmem>>, %arg5: memref<1x4x128xf32, #tpu.memory_space<vmem>>) attributes {dimension_semantics = [#tpu.dimension_semantics<parallel>, #tpu.dimension_semantics<parallel>], iteration_bounds = array<i64: 2, 1>, scalar_prefetch = 0 : i64, scratch_operands = 0 : i64, tpu.core_type = #tpu.core_type<tc>, window_params = [{transform_indices = @transform_0, window_bounds = array<i64: 1, 8, 4>}, {pipeline_mode = #tpu.pipeline_mode<synchronous>, transform_indices = @transform_1, window_bounds = array<i64: 8, 128>}, {pipeline_mode = #tpu.pipeline_mode<synchronous>, transform_indices = @transform_2, window_bounds = array<i64: 1, 128>}, {transform_indices = @transform_3, window_bounds = array<i64: 1, 4, 128>}]} {
    %c0 = arith.constant 0 : index
    %c0_0 = arith.constant 0 : index
    %0 = vector.load %arg3[%c0, %c0_0] : memref<8x128xf32, #tpu.memory_space<vmem>>, vector<8x128xf32>
    %c0_1 = arith.constant 0 : index
    %c0_2 = arith.constant 0 : index
    %1 = vector.load %arg4[%c0_1, %c0_2] : memref<1x128xf32, #tpu.memory_space<vmem>>, vector<1x128xf32>
    %c0_3 = arith.constant 0 : index
    %c0_4 = arith.constant 0 : index
    %c0_5 = arith.constant 0 : index
    %2 = vector.load %arg2[%c0_3, %c0_4, %c0_5] : memref<1x8x4xf32, #tpu.memory_space<vmem>>, vector<1x8x4xf32>
    %3 = vector.shape_cast %2 : vector<1x8x4xf32> to vector<8x4xf32>
    %cst = arith.constant dense<0.000000e+00> : vector<4x128xf32>
    %4 = tpu.matmul %3, %0, %cst {dimension_numbers = #tpu.dot_dimension_numbers<[0], [0], [1], [1], [0, 1, 1, 1], [], []>} : vector<8x4xf32>, vector<8x128xf32>, vector<4x128xf32> -> vector<4x128xf32>
    %5 = vector.broadcast %1 : vector<1x128xf32> to vector<4x128xf32>
    %6 = arith.addf %4, %5 : vector<4x128xf32>
    %c0_6 = arith.constant 0 : index
    %c0_7 = arith.constant 0 : index
    %c0_8 = arith.constant 0 : index
    %7 = vector.load %arg5[%c0_6, %c0_7, %c0_8] : memref<1x4x128xf32, #tpu.memory_space<vmem>>, vector<1x4x128xf32>
    %8 = vector.shape_cast %7 : vector<1x4x128xf32> to vector<4x128xf32>
    %9 = vector.shape_cast %6 : vector<4x128xf32> to vector<1x4x128xf32>
    tpu.vector_store %arg5[%c0_6, %c0_7, %c0_8], %9 {strides = array<i32>} : memref<1x4x128xf32, #tpu.memory_space<vmem>>, vector<1x4x128xf32>,
    return
  }
  func.func @transform_0(%arg0: i32, %arg1: i32) -> (i32, i32, i32) {
    %c0_i32 = arith.constant 0 : i32
    %c0_i32_0 = arith.constant 0 : i32
    return %arg0, %c0_i32, %arg1 : i32, i32, i32
  }
  func.func @transform_1(%arg0: i32, %arg1: i32) -> (i32, i32) {
    %c0_i32 = arith.constant 0 : i32
    %c0_i32_0 = arith.constant 0 : i32
    %c0_i32_1 = arith.constant 0 : i32
    return %c0_i32, %c0_i32_0 : i32, i32
  }
  func.func @transform_2(%arg0: i32, %arg1: i32) -> (i32, i32) {
    %c0_i32 = arith.constant 0 : i32
    %c0_i32_0 = arith.constant 0 : i32
    %c0_i32_1 = arith.constant 0 : i32
    return %c0_i32, %c0_i32_0 : i32, i32
  }
  func.func @transform_3(%arg0: i32, %arg1: i32) -> (i32, i32, i32) {
    %c0_i32 = arith.constant 0 : i32
    %c0_i32_0 = arith.constant 0 : i32
    return %arg0, %arg1, %c0_i32 : i32, i32, i32
  }
}

module attributes {stable_mosaic.version = 11 : i64} {
  func.func @_inverted_embedding_kernel(%arg0: i32, %arg1: i32, %arg2: memref<1x8x4xf32, #tpu.memory_space<vmem>>, %arg3: memref<8x128xf32, #tpu.memory_space<vmem>>, %arg4: memref<1x128xf32, #tpu.memory_space<vmem>>, %arg5: memref<1x4x128xf32, #tpu.memory_space<vmem>>) attributes {dimension_semantics = [#tpu.dimension_semantics<parallel>, #tpu.dimension_semantics<parallel>], iteration_bounds = array<i64: 2, 1>, scalar_prefetch = 0 : i64, scratch_operands = 0 : i64, tpu.core_type = #tpu.core_type<tc>, window_params = [{transform_indices = @transform_0, window_bounds = array<i64: 1, 8, 4>}, {pipeline_mode = #tpu.pipeline_mode<synchronous>, transform_indices = @transform_1, window_bounds = array<i64: 8, 128>}, {pipeline_mode = #tpu.pipeline_mode<synchronous>, transform_indices = @transform_2, window_bounds = array<i64: 1, 128>}, {transform_indices = @transform_3, window_bounds = array<i64: 1, 4, 128>}]} {
    %c0 = arith.constant 0 : index
    %c0_0 = arith.constant 0 : index
    %0 = vector.load %arg3[%c0, %c0_0] : memref<8x128xf32, #tpu.memory_space<vmem>>, vector<8x128xf32>
    %c0_1 = arith.constant 0 : index
    %c0_2 = arith.constant 0 : index
    %1 = vector.load %arg4[%c0_1, %c0_2] : memref<1x128xf32, #tpu.memory_space<vmem>>, vector<1x128xf32>
    %c0_3 = arith.constant 0 : index
    %c0_4 = arith.constant 0 : index
    %c0_5 = arith.constant 0 : index
    %2 = vector.load %arg2[%c0_3, %c0_4, %c0_5] : memref<1x8x4xf32, #tpu.memory_space<vmem>>, vector<1x8x4xf32>
    %3 = vector.shape_cast %2 : vector<1x8x4xf32> to vector<8x4xf32>
    %cst = arith.constant dense<0.000000e+00> : vector<4x128xf32>
    %4 = tpu.matmul %3, %0, %cst {dimension_numbers = #tpu.dot_dimension_numbers<[0], [0], [1], [1], [0, 1, 1, 1], [], []>} : vector<8x4xf32>, vector<8x128xf32>, vector<4x128xf32> -> vector<4x128xf32>
    %5 = vector.broadcast %1 : vector<1x128xf32> to vector<4x128xf32>
    %6 = arith.addf %4, %5 : vector<4x128xf32>
    %c0_6 = arith.constant 0 : index
    %c0_7 = arith.constant 0 : index
    %c0_8 = arith.constant 0 : index
    %7 = vector.load %arg5[%c0_6, %c0_7, %c0_8] : memref<1x4x128xf32, #tpu.memory_space<vmem>>, vector<1x4x128xf32>
    %8 = vector.shape_cast %7 : vector<1x4x128xf32> to vector<4x128xf32>
    %9 = vector.shape_cast %6 : vector<4x128xf32> to vector<1x4x128xf32>
    tpu.vector_store %arg5[%c0_6, %c0_7, %c0_8], %9 {strides = array<i32>} : memref<1x4x128xf32, #tpu.memory_space<vmem>>, vector<1x4x128xf32>,
    return
  }
  func.func @transform_0(%arg0: i32, %arg1: i32) -> (i32, i32, i32) {
    %c0_i32 = arith.constant 0 : i32
    %c0_i32_0 = arith.constant 0 : i32
    return %arg0, %c0_i32, %arg1 : i32, i32, i32
  }
  func.func @transform_1(%arg0: i32, %arg1: i32) -> (i32, i32) {
    %c0_i32 = arith.constant 0 : i32
    %c0_i32_0 = arith.constant 0 : i32
    %c0_i32_1 = arith.constant 0 : i32
    return %c0_i32, %c0_i32_0 : i32, i32
  }
  func.func @transform_2(%arg0: i32, %arg1: i32) -> (i32, i32) {
    %c0_i32 = arith.constant 0 : i32
    %c0_i32_0 = arith.constant 0 : i32
    %c0_i32_1 = arith.constant 0 : i32
    return %c0_i32, %c0_i32_0 : i32, i32
  }
  func.func @transform_3(%arg0: i32, %arg1: i32) -> (i32, i32, i32) {
    %c0_i32 = arith.constant 0 : i32
    %c0_i32_0 = arith.constant 0 : i32
    return %arg0, %arg1, %c0_i32 : i32, i32, i32
  }
}

</mosaic_0001>

<llo_original>
// kernel: tpu_custom_call.1
$region0: #{tpu_custom_call.1}
  #allocation0 [shape = 'u32[]', space=smem, size = 0x4, offset = 0x4, fixed_abs, tag = 'smem constant byte address 0x4 - core index']
  #allocation1 [shape = 'u32[144,128]{1,0:T(1,128)}', space=vmem, size = 0x12000, scoped, tag = 'internal scratch']
  %s0 = inlined_call_operand.vmem [shape: f32[2,8,4], index: 0, kind: input, shape index: {}]
  %s1 = inlined_call_operand.vmem [shape: f32[8,128], index: 1, kind: input, shape index: {}]
  %s2 = inlined_call_operand.vmem [shape: f32[1,128], index: 2, kind: input, shape index: {}]
  %s3 = inlined_call_operand.hbm [shape: f32[2,4,128], index: 3, kind: output, shape index: {}]
  %s4 = sld [smem:[#allocation0]]
  $region45: #{tpu_custom_call.1} parent=0
    _
  %s6 = ssub.s32 1, %s4
  %s7 = scalar_select 0, %s6, %s4
  $region1: #{tpu_custom_call.1} parent=0
    #allocation2 [shape = 'u8[4096]{0}', space=vmem, size = 0x1000, scoped, tag = 'output window, operand 0']
    #allocation3 [shape = 's32[2]{0}', space=sflag, size = 0x8, scoped, tag = 'scoped memory for tpu_custom_call.1']
    %8 = vsyncpa [#allocation3], 0
    %s9 = scalar_lea.sflag [#allocation3], 1
    %10 = vsyncpa %s9, 0
    loop: start=0, step=1, limit=4
    $region2: #{tpu_custom_call.1} parent=1 // loop_pre_header
      _
    $region3: #{tpu_custom_call.1} parent=1 // loop_header
      %s12 = sphi 0, %s16
      %p13 = scmp.ge.s32.totalorder %s12, 4
      %s19 = sphi 0, %s31
      %s20 = sphi 0, %s27
      %s21 = sphi 0, %s19
      %s22 = sphi 0, %s20
      %s23 = sphi 0, %s21
      %s24 = sphi 0, %s22
      %s36 = sphi 0, %s38
      %s39 = sphi 0, %s36
      %s40 = sphi 0, %s39
      %s56 = sphi 0, %s40
      %s60 = sphi 0, %s60
      %s62 = sphi 0, %s60
      %s63 = sphi 0, %s62
      %s77 = sphi 0, %s63
      %s81 = sphi 0, %s81
      %s83 = sphi 0, %s81
      %s84 = sphi 0, %s83
      %s98 = sphi 0, %s84
      %s106 = sphi 0, %s108
      %s109 = sphi 0, %s106
      %s110 = sphi 0, %s109
      %s126 = sphi 0, %s110
    $region4: #{tpu_custom_call.1} parent=1 // loop_header_branch
      %15 = sbr.rel (%p13) target = $region8
    $region5: #{tpu_custom_call.1} parent=1 // loop_body
      %s17 = ssub.s32 %s12, 1
      %s18 = ssub.s32 %s12, 2
      %s25 = sadd.s32 1, %s20
      %p26 = scmp.ge.s32.totalorder %s25, 1
      %s27 = scalar_select %p26, 0, %s25
      %s28 = sadd.s32 1, %s19
      %s29 = scalar_select %p26, %s28, %s19
      %p30 = scmp.ge.s32.totalorder %s29, 2
      %s31 = scalar_select %p30, 0, %s29
      %s32 = ssub.s32 %s19, %s31
      %s33 = ssub.s32 %s20, %s27
      %s34 = sor.u32 %s32, %s33
      %p35 = scmp.eq.s32.totalorder %s34, 0
      %s37 = sadd.s32 %s36, 1
      %s38 = scalar_select %p35, %s36, %s37
      %p41 = pneg %p35
      %p42 = scmp.eq.s32.totalorder %s12, 1
      %p43 = por %p41, %p42
      %p44 = scmp.ne.s32.totalorder %s36, %s39
      %p45 = scmp.eq.s32.totalorder %s12, 0
      %p46 = por %p44, %p45
      %p47 = scmp.ne.s32.totalorder %s36, %s39
      %p48 = scmp.eq.s32.totalorder %s17, 1
      %p49 = por %p47, %p48
      %p50 = scmp.ne.s32.totalorder %s39, %s40
      %p51 = scmp.eq.s32.totalorder %s17, 0
      %p52 = por %p50, %p51
      %p53 = scmp.ne.s32.totalorder %s39, %s40
      %p54 = scmp.eq.s32.totalorder %s18, 1
      %p55 = por %p53, %p54
      %p57 = scmp.ne.s32.totalorder %s40, %s56
      %p58 = scmp.eq.s32.totalorder %s18, 0
      %p59 = por %p57, %p58
      %s61 = sadd.s32 %s60, 1
      %p64 = scmp.eq.s32.totalorder %s12, 1
      %p65 = scmp.ne.s32.totalorder %s60, %s62
      %p66 = scmp.eq.s32.totalorder %s12, 0
      %p67 = por %p65, %p66
      %p68 = scmp.ne.s32.totalorder %s60, %s62
      %p69 = scmp.eq.s32.totalorder %s17, 1
      %p70 = por %p68, %p69
      %p71 = scmp.ne.s32.totalorder %s62, %s63
      %p72 = scmp.eq.s32.totalorder %s17, 0
      %p73 = por %p71, %p72
      %p74 = scmp.ne.s32.totalorder %s62, %s63
      %p75 = scmp.eq.s32.totalorder %s18, 1
      %p76 = por %p74, %p75
      %p78 = scmp.ne.s32.totalorder %s63, %s77
      %p79 = scmp.eq.s32.totalorder %s18, 0
      %p80 = por %p78, %p79
      %s82 = sadd.s32 %s81, 1
      %p85 = scmp.eq.s32.totalorder %s12, 1
      %p86 = scmp.ne.s32.totalorder %s81, %s83
      %p87 = scmp.eq.s32.totalorder %s12, 0
      %p88 = por %p86, %p87
      %p89 = scmp.ne.s32.totalorder %s81, %s83
      %p90 = scmp.eq.s32.totalorder %s17, 1
      %p91 = por %p89, %p90
      %p92 = scmp.ne.s32.totalorder %s83, %s84
      %p93 = scmp.eq.s32.totalorder %s17, 0
      %p94 = por %p92, %p93
      %p95 = scmp.ne.s32.totalorder %s83, %s84
      %p96 = scmp.eq.s32.totalorder %s18, 1
      %p97 = por %p95, %p96
      %p99 = scmp.ne.s32.totalorder %s84, %s98
      %p100 = scmp.eq.s32.totalorder %s18, 0
      %p101 = por %p99, %p100
      %s102 = ssub.s32 %s19, %s31
      %s103 = ssub.s32 %s20, %s27
      %s104 = sor.u32 %s102, %s103
      %p105 = scmp.eq.s32.totalorder %s104, 0
      %s107 = sadd.s32 %s106, 1
      %s108 = scalar_select %p105, %s106, %s107
      %p111 = pneg %p105
      %p112 = scmp.eq.s32.totalorder %s12, 1
      %p113 = por %p111, %p112
      %p114 = scmp.ne.s32.totalorder %s106, %s109
      %p115 = scmp.eq.s32.totalorder %s12, 0
      %p116 = por %p114, %p115
      %p117 = scmp.ne.s32.totalorder %s106, %s109
      %p118 = scmp.eq.s32.totalorder %s17, 1
      %p119 = por %p117, %p118
      %p120 = scmp.ne.s32.totalorder %s109, %s110
      %p121 = scmp.eq.s32.totalorder %s17, 0
      %p122 = por %p120, %p121
      %p123 = scmp.ne.s32.totalorder %s109, %s110
      %p124 = scmp.eq.s32.totalorder %s18, 1
      %p125 = por %p123, %p124
      %p127 = scmp.ne.s32.totalorder %s110, %s126
      %p128 = scmp.eq.s32.totalorder %s18, 0
      %p129 = por %p127, %p128
      %p130 = scmp.le.s32.totalorder 1, %s12
      %p131 = scmp.lt.s32.totalorder %s12, 3
      %p132 = pnand %p130, %p131
      %p133 = pneg %p132
      // Predicated region
      $region9: #{tpu_custom_call.1} parent=5 // pred_check
        _
      $region10: #{tpu_custom_call.1} parent=5 // pred_check_branch
        %135 = sbr.rel (%p132) target = $region12
      $region11: #{tpu_custom_call.1} parent=5 // pred_region
        %s136 = ssub.s32 %s12, 1
        // Predicated region
        $region13: #{tpu_custom_call.1} parent=11 // pred_check
          %p137 = pneg %p73
        $region14: #{tpu_custom_call.1} parent=11 // pred_check_branch
          %139 = sbr.rel (%p137) target = $region16
        $region15: #{tpu_custom_call.1} parent=11 // pred_region
          _
        $region16: #{tpu_custom_call.1} parent=11 // pred_fallthru
          _
        // Predicated region
        $region17: #{tpu_custom_call.1} parent=11 // pred_check
          %p140 = pneg %p94
        $region18: #{tpu_custom_call.1} parent=11 // pred_check_branch
          %142 = sbr.rel (%p140) target = $region20
        $region19: #{tpu_custom_call.1} parent=11 // pred_region
          _
        $region20: #{tpu_custom_call.1} parent=11 // pred_fallthru
          _
      $region12: #{tpu_custom_call.1} parent=5 // pred_fallthru
        _
      %p143 = scmp.lt.s32.totalorder %s12, 2
      // Predicated region
      $region21: #{tpu_custom_call.1} parent=5 // pred_check
        %p144 = pneg %p143
      $region22: #{tpu_custom_call.1} parent=5 // pred_check_branch
        %146 = sbr.rel (%p144) target = $region24
      $region23: #{tpu_custom_call.1} parent=5 // pred_region
        // Predicated region
        $region25: #{tpu_custom_call.1} parent=23 // pred_check
          %p147 = pneg %p46
        $region26: #{tpu_custom_call.1} parent=23 // pred_check_branch
          %149 = sbr.rel (%p147) target = $region28
        $region27: #{tpu_custom_call.1} parent=23 // pred_region
          %p150 = scmp.lt.s32.totalorder %s19, 1
          %s151 = scalar_select %p150, %s19, 1
          %p152 = scmp.lt.s32.totalorder %s20, 0
          %s153 = scalar_select %p152, %s20, 0
          %s154 = sadd.s32 %s153, %s151
          %s155 = smul.addr %s154, 8
          %s156 = scalar_lea.vmem %s0, %s155
        $region28: #{tpu_custom_call.1} parent=23 // pred_fallthru
          _
      $region24: #{tpu_custom_call.1} parent=5 // pred_fallthru
        _
      %p157 = scmp.le.s32.totalorder 1, %s12
      %p158 = scmp.lt.s32.totalorder %s12, 3
      %p159 = pnand %p157, %p158
      %p160 = pneg %p159
      // Predicated region
      $region29: #{tpu_custom_call.1} parent=5 // pred_check
        _
      $region30: #{tpu_custom_call.1} parent=5 // pred_check_branch
        %162 = sbr.rel (%p159) target = $region32
      $region31: #{tpu_custom_call.1} parent=5 // pred_region
        %s163 = ssub.s32 %s12, 1
        %p164 = scmp.lt.s32.totalorder %s21, 1
        %s165 = scalar_select %p164, %s21, 1
        %p166 = scmp.lt.s32.totalorder %s22, 0
        %s167 = scalar_select %p166, %s22, 0
        %s168 = sadd.s32 %s167, %s165
        %s169 = smul.addr %s168, 8
        %s170 = scalar_lea.vmem %s0, %s169
        %p171 = pneg %p52
        %p172 = pneg %p49
        %p173 = pneg %p73
        %p174 = pneg %p70
        %p175 = pneg %p94
        %p176 = pneg %p91
        %p177 = pneg %p122
        %p178 = pneg %p119
        %s179 = sand.u32 %s109, 1
        %s180 = scalar_lea.sflag [#allocation3], %s179
        %s181 = sand.u32 %s109, 1
        %s182 = smul.addr %s181, 4
        %s183 = scalar_lea.vmem [#allocation2], %s182
        %p184 = scmp.lt.s32.totalorder %s21, 1
        %s185 = scalar_select %p184, %s21, 1
        %p186 = scmp.lt.s32.totalorder %s22, 0
        %s187 = scalar_select %p186, %s22, 0
        %s188 = sadd.s32 %s187, %s185
        %s189 = smul.addr %s188, 8
        %s190 = scalar_lea.vmem %s0, %s189
        %v191 = vld [vmem:[%s1] sm:$0xff]
        %v192 = vld [vmem:[%s2] sm:$0x1]
        %v193 = vld [vmem:[%s190] sm:$0xff]
        %v195 = vlaneseq
        %v196 = vshrl.u32 %v195, 7
        %v197 = vsub.s32 0, %v196
        %v198 = vrot.slane %v192, %v197
        %200 = vxpose.xlu0.b32.start [1/16] %v193, 128
        %201 = vxpose.xlu0.b32.cont [2/16] 0.0, 128
        %202 = vxpose.xlu0.b32.cont [3/16] 0.0, 128
        %203 = vxpose.xlu0.b32.cont [4/16] 0.0, 128
        %204 = vxpose.xlu0.b32.cont [5/16] 0.0, 128
        %205 = vxpose.xlu0.b32.cont [6/16] 0.0, 128
        %206 = vxpose.xlu0.b32.cont [7/16] 0.0, 128
        %207 = vxpose.xlu0.b32.cont [8/16] 0.0, 128
        %208 = vxpose.xlu0.b32.cont [9/16] 0.0, 128
        %209 = vxpose.xlu0.b32.cont [10/16] 0.0, 128
        %210 = vxpose.xlu0.b32.cont [11/16] 0.0, 128
        %211 = vxpose.xlu0.b32.cont [12/16] 0.0, 128
        %212 = vxpose.xlu0.b32.cont [13/16] 0.0, 128
        %213 = vxpose.xlu0.b32.cont [14/16] 0.0, 128
        %214 = vxpose.xlu0.b32.cont [15/16] 0.0, 128
        %215 = vxpose.xlu0.b32.end [16/16] 0.0, 128
        %v216 = vpop.trf.xlu0
        %v217 = vpop.trf.xlu0
        %v218 = vpop.trf.xlu0
        %v219 = vpop.trf.xlu0
        %v220 = vpop.trf.xlu0
        %v221 = vpop.trf.xlu0
        %v222 = vpop.trf.xlu0
        %v223 = vpop.trf.xlu0
        %v224 = vpop.trf.xlu0
        %v225 = vpop.trf.xlu0
        %v226 = vpop.trf.xlu0
        %v227 = vpop.trf.xlu0
        %v228 = vpop.trf.xlu0
        %v229 = vpop.trf.xlu0
        %v230 = vpop.trf.xlu0
        %v231 = vpop.trf.xlu0
        %vm232 = vcmask 64512
        %v234 = vsel %vm232, %v216, 0
        %236 = vmatprep.subr.mxu0 0.0
        %237 = vmatpush1.msra.mxu0 %v191
        %238 = vmatprep.subr.mxu0 0.0
        %239 = vmatpush1.msra.mxu0 0.0
        %240 = vmatprep.subr.mxu0 0.0
        %241 = vmatpush1.msra.mxu0 0.0
        %242 = vmatprep.subr.mxu0 0.0
        %243 = vmatpush1.msra.mxu0 0.0
        %244 = vmatprep.subr.mxu0 0.0
        %245 = vmatpush1.msra.mxu0 0.0
        %246 = vmatprep.subr.mxu0 0.0
        %247 = vmatpush1.msra.mxu0 0.0
        %248 = vmatprep.subr.mxu0 0.0
        %249 = vmatpush1.msra.mxu0 0.0
        %250 = vmatprep.subr.mxu0 0.0
        %251 = vmatpush1.msra.mxu0 0.0
        %252 = vmatprep.subr.mxu0 0.0
        %253 = vmatpush1.msra.mxu0 0.0
        %254 = vmatprep.subr.mxu0 0.0
        %255 = vmatpush1.msra.mxu0 0.0
        %256 = vmatprep.subr.mxu0 0.0
        %257 = vmatpush1.msra.mxu0 0.0
        %258 = vmatprep.subr.mxu0 0.0
        %259 = vmatpush1.msra.mxu0 0.0
        %260 = vmatprep.subr.mxu0 0.0
        %261 = vmatpush1.msra.mxu0 0.0
        %262 = vmatprep.subr.mxu0 0.0
        %263 = vmatpush1.msra.mxu0 0.0
        %264 = vmatprep.subr.mxu0 0.0
        %265 = vmatpush1.msra.mxu0 0.0
        %266 = vmatprep.subr.mxu0 0.0
        %267 = vmatpush1.msra.mxu0 0.0
        %268 = vmatprep.subr.mxu0 0.0
        %269 = vmatpush1.msra.mxu0 0.0
        %270 = vmatprep.subr.mxu0 0.0
        %271 = vmatpush1.msra.mxu0 0.0
        %272 = vmatprep.subr.mxu0 0.0
        %273 = vmatpush1.msra.mxu0 0.0
        %274 = vmatprep.subr.mxu0 0.0
        %275 = vmatpush1.msra.mxu0 0.0
        %276 = vmatprep.subr.mxu0 0.0
        %277 = vmatpush1.msra.mxu0 0.0
        %278 = vmatprep.subr.mxu0 0.0
        %279 = vmatpush1.msra.mxu0 0.0
        %280 = vmatprep.subr.mxu0 0.0
        %281 = vmatpush1.msra.mxu0 0.0
        %282 = vmatprep.subr.mxu0 0.0
        %283 = vmatpush1.msra.mxu0 0.0
        %284 = vmatprep.subr.mxu0 0.0
        %285 = vmatpush1.msra.mxu0 0.0
        %286 = vmatprep.subr.mxu0 0.0
        %287 = vmatpush1.msra.mxu0 0.0
        %288 = vmatprep.subr.mxu0 0.0
        %289 = vmatpush1.msra.mxu0 0.0
        %290 = vmatprep.subr.mxu0 0.0
        %291 = vmatpush1.msra.mxu0 0.0
        %292 = vmatprep.subr.mxu0 0.0
        %293 = vmatpush1.msra.mxu0 0.0
        %294 = vmatprep.subr.mxu0 0.0
        %295 = vmatpush1.msra.mxu0 0.0
        %296 = vmatprep.subr.mxu0 0.0
        %297 = vmatpush1.msra.mxu0 0.0
        %298 = vmatprep.subr.mxu0 0.0
        %299 = vmatpush1.msra.mxu0 0.0
        %300 = vmatprep.mubr.f32.mxu0 0.0
        %301 = vmatmul.mubr.f32.gmra.mrb[0].mxu0 %v234
        %v302 = vpop.f32.mrb[0].mxu0
        %v303 = vadd.f32 %v198, %v302
        %v304 = vpop.f32.mrb[0].mxu0
        %305 = vdwg.mxu0
        %306 = vst [vmem:[%s183] sm:$0xf] %v303
        %s307 = sand.u32 %s109, 1
        %s308 = scalar_lea.sflag [#allocation3], %s307
        %s309 = sand.u32 %s109, 1
        %s310 = smul.addr %s309, 4
        %s311 = scalar_lea.vmem [#allocation2], %s310
        // Predicated region
        $region33: #{tpu_custom_call.1} parent=31 // pred_check
          %p312 = pneg %p119
        $region34: #{tpu_custom_call.1} parent=31 // pred_check_branch
          %314 = sbr.rel (%p312) target = $region36
        $region35: #{tpu_custom_call.1} parent=31 // pred_region
          %s316 = ssub.s32 64, 64
          %317 = vsyncadd %s308, %s316
          %s318 = sadd.s32 %s22, %s21
          %s319 = smul.addr %s318, 64
          %s320 = scalar_lea.hbm %s3, %s319
          %s322 = sshll.u32 %s311, 4
          %s323 = int_to_ptr.vmem [resolvable:$true] %s322
          %325 = dma.vmem_to_hbm [thread:$0]  %s323, 64, %s320, %s308
        $region36: #{tpu_custom_call.1} parent=31 // pred_fallthru
          _
      $region32: #{tpu_custom_call.1} parent=5 // pred_fallthru
        _
      %p326 = scmp.le.s32.totalorder 2, %s12
      // Predicated region
      $region37: #{tpu_custom_call.1} parent=5 // pred_check
        %p327 = pneg %p326
      $region38: #{tpu_custom_call.1} parent=5 // pred_check_branch
        %329 = sbr.rel (%p327) target = $region40
      $region39: #{tpu_custom_call.1} parent=5 // pred_region
        %s330 = ssub.s32 %s12, 2
        // Predicated region
        $region41: #{tpu_custom_call.1} parent=39 // pred_check
          %p331 = pneg %p125
        $region42: #{tpu_custom_call.1} parent=39 // pred_check_branch
          %333 = sbr.rel (%p331) target = $region44
        $region43: #{tpu_custom_call.1} parent=39 // pred_region
          %s334 = sand.u32 %s110, 1
          %s335 = scalar_lea.sflag [#allocation3], %s334
          %s336 = sand.u32 %s110, 1
          %s337 = smul.addr %s336, 4
          %s338 = scalar_lea.vmem [#allocation2], %s337
          %339 = dma.done %s335, 64
        $region44: #{tpu_custom_call.1} parent=39 // pred_fallthru
          _
      $region40: #{tpu_custom_call.1} parent=5 // pred_fallthru
        _
    $region6: #{tpu_custom_call.1} parent=1 // loop_footer
      %s16 = sadd.s32 1, %s12
    $region7: #{tpu_custom_call.1} parent=1 // loop_footer_branch
      %11 = sbr.rel target = $region3
    $region8: #{tpu_custom_call.1} parent=1 // loop_exit
      _
    %340 = vsyncpa [#allocation3], 1
    %s341 = scalar_lea.sflag [#allocation3], 1
    %342 = vsyncpa %s341, 1

// kernel: tpu_custom_call.1
$region0: #{tpu_custom_call.1}
  #allocation0 [shape = 'u32[]', space=smem, size = 0x4, offset = 0x4, fixed_abs, tag = 'smem constant byte address 0x4 - core index']
  #allocation1 [shape = 'u32[144,128]{1,0:T(1,128)}', space=vmem, size = 0x12000, scoped, tag = 'internal scratch']
  %s0 = inlined_call_operand.vmem [shape: f32[2,8,4], index: 0, kind: input, shape index: {}]
  %s1 = inlined_call_operand.vmem [shape: f32[8,128], index: 1, kind: input, shape index: {}]
  %s2 = inlined_call_operand.vmem [shape: f32[1,128], index: 2, kind: input, shape index: {}]
  %s3 = inlined_call_operand.hbm [shape: f32[2,4,128], index: 3, kind: output, shape index: {}]
  %s4 = sld [smem:[#allocation0]]
  $region45: #{tpu_custom_call.1} parent=0
    _
  %s6 = ssub.s32 1, %s4
  %s7 = scalar_select 0, %s6, %s4
  $region1: #{tpu_custom_call.1} parent=0
    #allocation2 [shape = 'u8[4096]{0}', space=vmem, size = 0x1000, scoped, tag = 'output window, operand 0']
    #allocation3 [shape = 's32[2]{0}', space=sflag, size = 0x8, scoped, tag = 'scoped memory for tpu_custom_call.1']
    %8 = vsyncpa [#allocation3], 0
    %s9 = scalar_lea.sflag [#allocation3], 1
    %10 = vsyncpa %s9, 0
    loop: start=0, step=1, limit=4
    $region2: #{tpu_custom_call.1} parent=1 // loop_pre_header
      _
    $region3: #{tpu_custom_call.1} parent=1 // loop_header
      %s12 = sphi 0, %s16
      %p13 = scmp.ge.s32.totalorder %s12, 4
      %s19 = sphi 0, %s31
      %s20 = sphi 0, %s27
      %s21 = sphi 0, %s19
      %s22 = sphi 0, %s20
      %s23 = sphi 0, %s21
      %s24 = sphi 0, %s22
      %s36 = sphi 0, %s38
      %s39 = sphi 0, %s36
      %s40 = sphi 0, %s39
      %s56 = sphi 0, %s40
      %s60 = sphi 0, %s60
      %s62 = sphi 0, %s60
      %s63 = sphi 0, %s62
      %s77 = sphi 0, %s63
      %s81 = sphi 0, %s81
      %s83 = sphi 0, %s81
      %s84 = sphi 0, %s83
      %s98 = sphi 0, %s84
      %s106 = sphi 0, %s108
      %s109 = sphi 0, %s106
      %s110 = sphi 0, %s109
      %s126 = sphi 0, %s110
    $region4: #{tpu_custom_call.1} parent=1 // loop_header_branch
      %15 = sbr.rel (%p13) target = $region8
    $region5: #{tpu_custom_call.1} parent=1 // loop_body
      %s17 = ssub.s32 %s12, 1
      %s18 = ssub.s32 %s12, 2
      %s25 = sadd.s32 1, %s20
      %p26 = scmp.ge.s32.totalorder %s25, 1
      %s27 = scalar_select %p26, 0, %s25
      %s28 = sadd.s32 1, %s19
      %s29 = scalar_select %p26, %s28, %s19
      %p30 = scmp.ge.s32.totalorder %s29, 2
      %s31 = scalar_select %p30, 0, %s29
      %s32 = ssub.s32 %s19, %s31
      %s33 = ssub.s32 %s20, %s27
      %s34 = sor.u32 %s32, %s33
      %p35 = scmp.eq.s32.totalorder %s34, 0
      %s37 = sadd.s32 %s36, 1
      %s38 = scalar_select %p35, %s36, %s37
      %p41 = pneg %p35
      %p42 = scmp.eq.s32.totalorder %s12, 1
      %p43 = por %p41, %p42
      %p44 = scmp.ne.s32.totalorder %s36, %s39
      %p45 = scmp.eq.s32.totalorder %s12, 0
      %p46 = por %p44, %p45
      %p47 = scmp.ne.s32.totalorder %s36, %s39
      %p48 = scmp.eq.s32.totalorder %s17, 1
      %p49 = por %p47, %p48
      %p50 = scmp.ne.s32.totalorder %s39, %s40
      %p51 = scmp.eq.s32.totalorder %s17, 0
      %p52 = por %p50, %p51
      %p53 = scmp.ne.s32.totalorder %s39, %s40
      %p54 = scmp.eq.s32.totalorder %s18, 1
      %p55 = por %p53, %p54
      %p57 = scmp.ne.s32.totalorder %s40, %s56
      %p58 = scmp.eq.s32.totalorder %s18, 0
      %p59 = por %p57, %p58
      %s61 = sadd.s32 %s60, 1
      %p64 = scmp.eq.s32.totalorder %s12, 1
      %p65 = scmp.ne.s32.totalorder %s60, %s62
      %p66 = scmp.eq.s32.totalorder %s12, 0
      %p67 = por %p65, %p66
      %p68 = scmp.ne.s32.totalorder %s60, %s62
      %p69 = scmp.eq.s32.totalorder %s17, 1
      %p70 = por %p68, %p69
      %p71 = scmp.ne.s32.totalorder %s62, %s63
      %p72 = scmp.eq.s32.totalorder %s17, 0
      %p73 = por %p71, %p72
      %p74 = scmp.ne.s32.totalorder %s62, %s63
      %p75 = scmp.eq.s32.totalorder %s18, 1
      %p76 = por %p74, %p75
      %p78 = scmp.ne.s32.totalorder %s63, %s77
      %p79 = scmp.eq.s32.totalorder %s18, 0
      %p80 = por %p78, %p79
      %s82 = sadd.s32 %s81, 1
      %p85 = scmp.eq.s32.totalorder %s12, 1
      %p86 = scmp.ne.s32.totalorder %s81, %s83
      %p87 = scmp.eq.s32.totalorder %s12, 0
      %p88 = por %p86, %p87
      %p89 = scmp.ne.s32.totalorder %s81, %s83
      %p90 = scmp.eq.s32.totalorder %s17, 1
      %p91 = por %p89, %p90
      %p92 = scmp.ne.s32.totalorder %s83, %s84
      %p93 = scmp.eq.s32.totalorder %s17, 0
      %p94 = por %p92, %p93
      %p95 = scmp.ne.s32.totalorder %s83, %s84
      %p96 = scmp.eq.s32.totalorder %s18, 1
      %p97 = por %p95, %p96
      %p99 = scmp.ne.s32.totalorder %s84, %s98
      %p100 = scmp.eq.s32.totalorder %s18, 0
      %p101 = por %p99, %p100
      %s102 = ssub.s32 %s19, %s31
      %s103 = ssub.s32 %s20, %s27
      %s104 = sor.u32 %s102, %s103
      %p105 = scmp.eq.s32.totalorder %s104, 0
      %s107 = sadd.s32 %s106, 1
      %s108 = scalar_select %p105, %s106, %s107
      %p111 = pneg %p105
      %p112 = scmp.eq.s32.totalorder %s12, 1
      %p113 = por %p111, %p112
      %p114 = scmp.ne.s32.totalorder %s106, %s109
      %p115 = scmp.eq.s32.totalorder %s12, 0
      %p116 = por %p114, %p115
      %p117 = scmp.ne.s32.totalorder %s106, %s109
      %p118 = scmp.eq.s32.totalorder %s17, 1
      %p119 = por %p117, %p118
      %p120 = scmp.ne.s32.totalorder %s109, %s110
      %p121 = scmp.eq.s32.totalorder %s17, 0
      %p122 = por %p120, %p121
      %p123 = scmp.ne.s32.totalorder %s109, %s110
      %p124 = scmp.eq.s32.totalorder %s18, 1
      %p125 = por %p123, %p124
      %p127 = scmp.ne.s32.totalorder %s110, %s126
      %p128 = scmp.eq.s32.totalorder %s18, 0
      %p129 = por %p127, %p128
      %p130 = scmp.le.s32.totalorder 1, %s12
      %p131 = scmp.lt.s32.totalorder %s12, 3
      %p132 = pnand %p130, %p131
      %p133 = pneg %p132
      // Predicated region
      $region9: #{tpu_custom_call.1} parent=5 // pred_check
        _
      $region10: #{tpu_custom_call.1} parent=5 // pred_check_branch
        %135 = sbr.rel (%p132) target = $region12
      $region11: #{tpu_custom_call.1} parent=5 // pred_region
        %s136 = ssub.s32 %s12, 1
        // Predicated region
        $region13: #{tpu_custom_call.1} parent=11 // pred_check
          %p137 = pneg %p73
        $region14: #{tpu_custom_call.1} parent=11 // pred_check_branch
          %139 = sbr.rel (%p137) target = $region16
        $region15: #{tpu_custom_call.1} parent=11 // pred_region
          _
        $region16: #{tpu_custom_call.1} parent=11 // pred_fallthru
          _
        // Predicated region
        $region17: #{tpu_custom_call.1} parent=11 // pred_check
          %p140 = pneg %p94
        $region18: #{tpu_custom_call.1} parent=11 // pred_check_branch
          %142 = sbr.rel (%p140) target = $region20
        $region19: #{tpu_custom_call.1} parent=11 // pred_region
          _
        $region20: #{tpu_custom_call.1} parent=11 // pred_fallthru
          _
      $region12: #{tpu_custom_call.1} parent=5 // pred_fallthru
        _
      %p143 = scmp.lt.s32.totalorder %s12, 2
      // Predicated region
      $region21: #{tpu_custom_call.1} parent=5 // pred_check
        %p144 = pneg %p143
      $region22: #{tpu_custom_call.1} parent=5 // pred_check_branch
        %146 = sbr.rel (%p144) target = $region24
      $region23: #{tpu_custom_call.1} parent=5 // pred_region
        // Predicated region
        $region25: #{tpu_custom_call.1} parent=23 // pred_check
          %p147 = pneg %p46
        $region26: #{tpu_custom_call.1} parent=23 // pred_check_branch
          %149 = sbr.rel (%p147) target = $region28
        $region27: #{tpu_custom_call.1} parent=23 // pred_region
          %p150 = scmp.lt.s32.totalorder %s19, 1
          %s151 = scalar_select %p150, %s19, 1
          %p152 = scmp.lt.s32.totalorder %s20, 0
          %s153 = scalar_select %p152, %s20, 0
          %s154 = sadd.s32 %s153, %s151
          %s155 = smul.addr %s154, 8
          %s156 = scalar_lea.vmem %s0, %s155
        $region28: #{tpu_custom_call.1} parent=23 // pred_fallthru
          _
      $region24: #{tpu_custom_call.1} parent=5 // pred_fallthru
        _
      %p157 = scmp.le.s32.totalorder 1, %s12
      %p158 = scmp.lt.s32.totalorder %s12, 3
      %p159 = pnand %p157, %p158
      %p160 = pneg %p159
      // Predicated region
      $region29: #{tpu_custom_call.1} parent=5 // pred_check
        _
      $region30: #{tpu_custom_call.1} parent=5 // pred_check_branch
        %162 = sbr.rel (%p159) target = $region32
      $region31: #{tpu_custom_call.1} parent=5 // pred_region
        %s163 = ssub.s32 %s12, 1
        %p164 = scmp.lt.s32.totalorder %s21, 1
        %s165 = scalar_select %p164, %s21, 1
        %p166 = scmp.lt.s32.totalorder %s22, 0
        %s167 = scalar_select %p166, %s22, 0
        %s168 = sadd.s32 %s167, %s165
        %s169 = smul.addr %s168, 8
        %s170 = scalar_lea.vmem %s0, %s169
        %p171 = pneg %p52
        %p172 = pneg %p49
        %p173 = pneg %p73
        %p174 = pneg %p70
        %p175 = pneg %p94
        %p176 = pneg %p91
        %p177 = pneg %p122
        %p178 = pneg %p119
        %s179 = sand.u32 %s109, 1
        %s180 = scalar_lea.sflag [#allocation3], %s179
        %s181 = sand.u32 %s109, 1
        %s182 = smul.addr %s181, 4
        %s183 = scalar_lea.vmem [#allocation2], %s182
        %p184 = scmp.lt.s32.totalorder %s21, 1
        %s185 = scalar_select %p184, %s21, 1
        %p186 = scmp.lt.s32.totalorder %s22, 0
        %s187 = scalar_select %p186, %s22, 0
        %s188 = sadd.s32 %s187, %s185
        %s189 = smul.addr %s188, 8
        %s190 = scalar_lea.vmem %s0, %s189
        %v191 = vld [vmem:[%s1] sm:$0xff]
        %v192 = vld [vmem:[%s2] sm:$0x1]
        %v193 = vld [vmem:[%s190] sm:$0xff]
        %v195 = vlaneseq
        %v196 = vshrl.u32 %v195, 7
        %v197 = vsub.s32 0, %v196
        %v198 = vrot.slane %v192, %v197
        %200 = vxpose.xlu0.b32.start [1/16] %v193, 128
        %201 = vxpose.xlu0.b32.cont [2/16] 0.0, 128
        %202 = vxpose.xlu0.b32.cont [3/16] 0.0, 128
        %203 = vxpose.xlu0.b32.cont [4/16] 0.0, 128
        %204 = vxpose.xlu0.b32.cont [5/16] 0.0, 128
        %205 = vxpose.xlu0.b32.cont [6/16] 0.0, 128
        %206 = vxpose.xlu0.b32.cont [7/16] 0.0, 128
        %207 = vxpose.xlu0.b32.cont [8/16] 0.0, 128
        %208 = vxpose.xlu0.b32.cont [9/16] 0.0, 128
        %209 = vxpose.xlu0.b32.cont [10/16] 0.0, 128
        %210 = vxpose.xlu0.b32.cont [11/16] 0.0, 128
        %211 = vxpose.xlu0.b32.cont [12/16] 0.0, 128
        %212 = vxpose.xlu0.b32.cont [13/16] 0.0, 128
        %213 = vxpose.xlu0.b32.cont [14/16] 0.0, 128
        %214 = vxpose.xlu0.b32.cont [15/16] 0.0, 128
        %215 = vxpose.xlu0.b32.end [16/16] 0.0, 128
        %v216 = vpop.trf.xlu0
        %v217 = vpop.trf.xlu0
        %v218 = vpop.trf.xlu0
        %v219 = vpop.trf.xlu0
        %v220 = vpop.trf.xlu0
        %v221 = vpop.trf.xlu0
        %v222 = vpop.trf.xlu0
        %v223 = vpop.trf.xlu0
        %v224 = vpop.trf.xlu0
        %v225 = vpop.trf.xlu0
        %v226 = vpop.trf.xlu0
        %v227 = vpop.trf.xlu0
        %v228 = vpop.trf.xlu0
        %v229 = vpop.trf.xlu0
        %v230 = vpop.trf.xlu0
        %v231 = vpop.trf.xlu0
        %vm232 = vcmask 64512
        %v234 = vsel %vm232, %v216, 0
        %236 = vmatprep.subr.mxu0 0.0
        %237 = vmatpush1.msra.mxu0 %v191
        %238 = vmatprep.subr.mxu0 0.0
        %239 = vmatpush1.msra.mxu0 0.0
        %240 = vmatprep.subr.mxu0 0.0
        %241 = vmatpush1.msra.mxu0 0.0
        %242 = vmatprep.subr.mxu0 0.0
        %243 = vmatpush1.msra.mxu0 0.0
        %244 = vmatprep.subr.mxu0 0.0
        %245 = vmatpush1.msra.mxu0 0.0
        %246 = vmatprep.subr.mxu0 0.0
        %247 = vmatpush1.msra.mxu0 0.0
        %248 = vmatprep.subr.mxu0 0.0
        %249 = vmatpush1.msra.mxu0 0.0
        %250 = vmatprep.subr.mxu0 0.0
        %251 = vmatpush1.msra.mxu0 0.0
        %252 = vmatprep.subr.mxu0 0.0
        %253 = vmatpush1.msra.mxu0 0.0
        %254 = vmatprep.subr.mxu0 0.0
        %255 = vmatpush1.msra.mxu0 0.0
        %256 = vmatprep.subr.mxu0 0.0
        %257 = vmatpush1.msra.mxu0 0.0
        %258 = vmatprep.subr.mxu0 0.0
        %259 = vmatpush1.msra.mxu0 0.0
        %260 = vmatprep.subr.mxu0 0.0
        %261 = vmatpush1.msra.mxu0 0.0
        %262 = vmatprep.subr.mxu0 0.0
        %263 = vmatpush1.msra.mxu0 0.0
        %264 = vmatprep.subr.mxu0 0.0
        %265 = vmatpush1.msra.mxu0 0.0
        %266 = vmatprep.subr.mxu0 0.0
        %267 = vmatpush1.msra.mxu0 0.0
        %268 = vmatprep.subr.mxu0 0.0
        %269 = vmatpush1.msra.mxu0 0.0
        %270 = vmatprep.subr.mxu0 0.0
        %271 = vmatpush1.msra.mxu0 0.0
        %272 = vmatprep.subr.mxu0 0.0
        %273 = vmatpush1.msra.mxu0 0.0
        %274 = vmatprep.subr.mxu0 0.0
        %275 = vmatpush1.msra.mxu0 0.0
        %276 = vmatprep.subr.mxu0 0.0
        %277 = vmatpush1.msra.mxu0 0.0
        %278 = vmatprep.subr.mxu0 0.0
        %279 = vmatpush1.msra.mxu0 0.0
        %280 = vmatprep.subr.mxu0 0.0
        %281 = vmatpush1.msra.mxu0 0.0
        %282 = vmatprep.subr.mxu0 0.0
        %283 = vmatpush1.msra.mxu0 0.0
        %284 = vmatprep.subr.mxu0 0.0
        %285 = vmatpush1.msra.mxu0 0.0
        %286 = vmatprep.subr.mxu0 0.0
        %287 = vmatpush1.msra.mxu0 0.0
        %288 = vmatprep.subr.mxu0 0.0
        %289 = vmatpush1.msra.mxu0 0.0
        %290 = vmatprep.subr.mxu0 0.0
        %291 = vmatpush1.msra.mxu0 0.0
        %292 = vmatprep.subr.mxu0 0.0
        %293 = vmatpush1.msra.mxu0 0.0
        %294 = vmatprep.subr.mxu0 0.0
        %295 = vmatpush1.msra.mxu0 0.0
        %296 = vmatprep.subr.mxu0 0.0
        %297 = vmatpush1.msra.mxu0 0.0
        %298 = vmatprep.subr.mxu0 0.0
        %299 = vmatpush1.msra.mxu0 0.0
        %300 = vmatprep.mubr.f32.mxu0 0.0
        %301 = vmatmul.mubr.f32.gmra.mrb[0].mxu0 %v234
        %v302 = vpop.f32.mrb[0].mxu0
        %v303 = vadd.f32 %v198, %v302
        %v304 = vpop.f32.mrb[0].mxu0
        %305 = vdwg.mxu0
        %306 = vst [vmem:[%s183] sm:$0xf] %v303
        %s307 = sand.u32 %s109, 1
        %s308 = scalar_lea.sflag [#allocation3], %s307
        %s309 = sand.u32 %s109, 1
        %s310 = smul.addr %s309, 4
        %s311 = scalar_lea.vmem [#allocation2], %s310
        // Predicated region
        $region33: #{tpu_custom_call.1} parent=31 // pred_check
          %p312 = pneg %p119
        $region34: #{tpu_custom_call.1} parent=31 // pred_check_branch
          %314 = sbr.rel (%p312) target = $region36
        $region35: #{tpu_custom_call.1} parent=31 // pred_region
          %s316 = ssub.s32 64, 64
          %317 = vsyncadd %s308, %s316
          %s318 = sadd.s32 %s22, %s21
          %s319 = smul.addr %s318, 64
          %s320 = scalar_lea.hbm %s3, %s319
          %s322 = sshll.u32 %s311, 4
          %s323 = int_to_ptr.vmem [resolvable:$true] %s322
          %325 = dma.vmem_to_hbm [thread:$0]  %s323, 64, %s320, %s308
        $region36: #{tpu_custom_call.1} parent=31 // pred_fallthru
          _
      $region32: #{tpu_custom_call.1} parent=5 // pred_fallthru
        _
      %p326 = scmp.le.s32.totalorder 2, %s12
      // Predicated region
      $region37: #{tpu_custom_call.1} parent=5 // pred_check
        %p327 = pneg %p326
      $region38: #{tpu_custom_call.1} parent=5 // pred_check_branch
        %329 = sbr.rel (%p327) target = $region40
      $region39: #{tpu_custom_call.1} parent=5 // pred_region
        %s330 = ssub.s32 %s12, 2
        // Predicated region
        $region41: #{tpu_custom_call.1} parent=39 // pred_check
          %p331 = pneg %p125
        $region42: #{tpu_custom_call.1} parent=39 // pred_check_branch
          %333 = sbr.rel (%p331) target = $region44
        $region43: #{tpu_custom_call.1} parent=39 // pred_region
          %s334 = sand.u32 %s110, 1
          %s335 = scalar_lea.sflag [#allocation3], %s334
          %s336 = sand.u32 %s110, 1
          %s337 = smul.addr %s336, 4
          %s338 = scalar_lea.vmem [#allocation2], %s337
          %339 = dma.done %s335, 64
        $region44: #{tpu_custom_call.1} parent=39 // pred_fallthru
          _
      $region40: #{tpu_custom_call.1} parent=5 // pred_fallthru
        _
    $region6: #{tpu_custom_call.1} parent=1 // loop_footer
      %s16 = sadd.s32 1, %s12
    $region7: #{tpu_custom_call.1} parent=1 // loop_footer_branch
      %11 = sbr.rel target = $region3
    $region8: #{tpu_custom_call.1} parent=1 // loop_exit
      _
    %340 = vsyncpa [#allocation3], 1
    %s341 = scalar_lea.sflag [#allocation3], 1
    %342 = vsyncpa %s341, 1

</llo_original>
